<compile_context>
chip_gen: v6e
topology: v6e:2x2x1
jax: 0.10.0
libtpu: 0.0.40
codegen_flags: <defaults>
</compile_context>

<pallas_src>
import jax
import jax.numpy as jnp
from jax.experimental import pallas as pl
from jax.experimental.pallas import tpu as pltpu

THETA_DIM = 32
PIC_SIZE = 64


# --------------------------------------------------------------------------
# Kernel
# --------------------------------------------------------------------------
def decoder_kernel(x_ref, w1_ref, b1_ref, w2_ref, b2_ref, w3_ref, b3_ref,
                   out_ref):
    # x_ref  : (tile_m, PACK*theta_dim)  -- PACK original rows packed per lane-row
    # wK_ref : kron(I_PACK, W_K.T)       -- block-diagonal, applies the Linear to
    #                                       every packed sub-row in one MXU matmul
    # bK_ref : (1, PACK*pic_size)        -- broadcasts across the sublane (row) axis
    # out_ref: (tile_m, PACK*pic_size)   -- lane-dense (256-wide) unmasked stores
    h = jnp.dot(x_ref[...], w1_ref[...],
                preferred_element_type=jnp.float32) + b1_ref[...]
    h = jnp.maximum(h, 0.0)

    h = jnp.dot(h, w2_ref[...],
                preferred_element_type=jnp.float32) + b2_ref[...]
    h = jnp.maximum(h, 0.0)

    y = jnp.dot(h, w3_ref[...],
                preferred_element_type=jnp.float32) + b3_ref[...]
    out_ref[...] = jnp.tanh(y)


# --------------------------------------------------------------------------
# Wrapper
# --------------------------------------------------------------------------
def _round_up(n, m):
    return ((n + m - 1) // m) * m


def _pick_tile_rows(m, max_tile_m):
    """Tile over packed rows: multiple of 8 (sublane), as large as max_tile_m,
    and an EVEN number of grid steps when there is more than one tile of work
    (so v7x's two TensorCores get balanced halves)."""
    if m <= max_tile_m:
        return _round_up(max(m, 8), 8)
    g = pl.cdiv(m, max_tile_m)
    if g % 2:
        g += 1
    return _round_up(pl.cdiv(m, g), 8)


def decoder_forward(x, params, *, max_tile_rows=4096):
    """x: (batch, frame, n_particle, theta_dim) f32
       -> (batch, frame, n_particle, pic_size) f32."""
    w1, b1, w2, b2, w3, b3 = params
    batch, frame, n_particle, theta_dim = x.shape
    pic_size = w1.shape[0]

    # Pack rows so the input lane width becomes theta_dim*pack (=128) and the
    # output lane width pic_size*pack (=256): fully lane-dense, no transposes.
    pack = max(1, 128 // theta_dim)                    # = 4 for theta_dim=32
    in_w = pack * theta_dim
    out_w = pack * pic_size

    n = batch * frame * n_particle
    m = pl.cdiv(n, pack)                               # packed rows
    tile_m = _pick_tile_rows(m, max(8, max_tile_rows // pack))
    m_pad = _round_up(m, tile_m)
    n_pad = m_pad * pack

    # Flatten rows, pad (padded rows are computed then dropped), pack.
    x_flat = x.reshape(n, theta_dim)
    if n_pad != n:
        x_flat = jnp.pad(x_flat, ((0, n_pad - n), (0, 0)))
    x_packed = x_flat.reshape(m_pad, in_w)             # row-major reshape, no transpose

    # Block-diagonal weights / tiled biases (tiny: <= 256x256 f32 each).
    eye = jnp.eye(pack, dtype=jnp.float32)
    w1b = jnp.kron(eye, w1.T.astype(jnp.float32))      # (in_w, out_w)
    w2b = jnp.kron(eye, w2.T.astype(jnp.float32))      # (out_w, out_w)
    w3b = jnp.kron(eye, w3.T.astype(jnp.float32))      # (out_w, out_w)
    b1b = jnp.tile(b1.astype(jnp.float32), pack).reshape(1, out_w)
    b2b = jnp.tile(b2.astype(jnp.float32), pack).reshape(1, out_w)
    b3b = jnp.tile(b3.astype(jnp.float32), pack).reshape(1, out_w)

    grid = (m_pad // tile_m,)

    def resident(arr):
        # Full-array block with a constant index map -> stays resident in VMEM.
        return pl.BlockSpec(arr.shape, lambda i: (0, 0))

    # Advisory cost for XLA's scheduler (kernel I/O only; there are no
    # wrapper transposes any more).
    flops = 2 * n_pad * (theta_dim * pic_size + 2 * pic_size * pic_size)
    transcendentals = n_pad * pic_size                 # tanh
    bytes_accessed = 4 * (m_pad * in_w + m_pad * out_w
                          + in_w * out_w + 2 * out_w * out_w + 3 * out_w)

    # Explicit VMEM budget: double-buffered in/out blocks + intermediate
    # activations + (resident, possibly double-buffered) weights, plus slack.
    vmem_bytes = 4 * (2 * tile_m * in_w + 2 * tile_m * out_w
                      + 4 * tile_m * out_w
                      + 2 * (in_w * out_w + 2 * out_w * out_w + 3 * out_w))
    vmem_limit = int(min(64 * 1024 * 1024,
                         max(vmem_bytes + (4 << 20), 16 << 20)))

    out_packed = pl.pallas_call(
        decoder_kernel,
        out_shape=jax.ShapeDtypeStruct((m_pad, out_w), jnp.float32),
        grid_spec=pl.GridSpec(
            grid=grid,
            in_specs=[
                pl.BlockSpec((tile_m, in_w), lambda i: (i, 0)),   # packed x tile
                resident(w1b), resident(b1b),
                resident(w2b), resident(b2b),
                resident(w3b), resident(b3b),
            ],
            out_specs=pl.BlockSpec((tile_m, out_w), lambda i: (i, 0)),
        ),
        compiler_params=pltpu.CompilerParams(
            dimension_semantics=("parallel",),
            vmem_limit_bytes=vmem_limit),
        cost_estimate=pl.CostEstimate(
            flops=int(flops),
            transcendentals=int(transcendentals),
            bytes_accessed=int(bytes_accessed)),
    )(x_packed, w1b, b1b, w2b, b2b, w3b, b3b)

    # Unpack (row-major reshape, no transpose), drop padding, restore 4-D shape.
    out = out_packed.reshape(n_pad, pic_size)[:n]
    return out.reshape(batch, frame, n_particle, pic_size)


# --------------------------------------------------------------------------
# Params + pure-JAX reference
# --------------------------------------------------------------------------
def init_params(key, theta_dim=THETA_DIM, pic_size=PIC_SIZE):
    """PyTorch-Linear-style uniform(+-1/sqrt(fan_in)); W stored as (out, in)."""
    keys = jax.random.split(key, 6)

    def lin(kw, kb, fan_in, fan_out):
        bound = 1.0 / jnp.sqrt(float(fan_in))
        w = jax.random.uniform(kw, (fan_out, fan_in), jnp.float32, -bound, bound)
        b = jax.random.uniform(kb, (fan_out,), jnp.float32, -bound, bound)
        return w, b

    w1, b1 = lin(keys[0], keys[1], theta_dim, pic_size)
    w2, b2 = lin(keys[2], keys[3], pic_size, pic_size)
    w3, b3 = lin(keys[4], keys[5], pic_size, pic_size)
    return (w1, b1, w2, b2, w3, b3)


def decoder_ref(x, params):
    """Pure-JAX mirror of the PyTorch Decoder.forward."""
    w1, b1, w2, b2, w3, b3 = params
    batch, frame, n_particle, theta_dim = x.shape
    pic_size = w1.shape[0]
    h = x.reshape(-1, theta_dim)
    h = jnp.maximum(h @ w1.T + b1, 0.0)
    h = jnp.maximum(h @ w2.T + b2, 0.0)
    h = jnp.tanh(h @ w3.T + b3)
    return h.reshape(batch, frame, n_particle, pic_size)


# --------------------------------------------------------------------------
# Main
# --------------------------------------------------------------------------
if __name__ == "__main__":
    key = jax.random.PRNGKey(0)
    k_x, k_p, k_x2 = jax.random.split(key, 3)
    params = init_params(k_p)

    # Case 1: small shape, single grid step, rows pad to one packed tile.
    batch, frame, n_particle = 2, 8, 4                 # N = 64 rows
    x = jax.random.normal(k_x, (batch, frame, n_particle, THETA_DIM), jnp.float32)
    out = jax.block_until_ready(decoder_forward(x, params))
    ref = decoder_ref(x, params)
    assert out.shape == (batch, frame, n_particle, PIC_SIZE)
    assert jnp.allclose(out, ref, atol=1e-5, rtol=1e-5), "case-1 mismatch vs JAX reference"

    # Case 2: ragged N with a forced multi-step (even) grid + padding.
    b2_, f2_, p2_ = 3, 25, 7                           # N = 525 rows (not a multiple of pack/tile)
    x2 = jax.random.normal(k_x2, (b2_, f2_, p2_, THETA_DIM), jnp.float32)
    out2 = jax.block_until_ready(decoder_forward(x2, params, max_tile_rows=256))
    ref2 = decoder_ref(x2, params)
    assert out2.shape == (b2_, f2_, p2_, PIC_SIZE)
    assert jnp.allclose(out2, ref2, atol=1e-5, rtol=1e-5), "case-2 mismatch vs JAX reference"

    print("KERNEL_OK")
</pallas_src>

<mosaic_0001>
module attributes {stable_mosaic.version = 11 : i64} {
  func.func @decoder_kernel(%arg0: i32, %arg1: memref<16x128xf32, #tpu.memory_space<vmem>>, %arg2: memref<128x256xf32, #tpu.memory_space<vmem>>, %arg3: memref<1x256xf32, #tpu.memory_space<vmem>>, %arg4: memref<256x256xf32, #tpu.memory_space<vmem>>, %arg5: memref<1x256xf32, #tpu.memory_space<vmem>>, %arg6: memref<256x256xf32, #tpu.memory_space<vmem>>, %arg7: memref<1x256xf32, #tpu.memory_space<vmem>>, %arg8: memref<16x256xf32, #tpu.memory_space<vmem>>) attributes {dimension_semantics = [#tpu.dimension_semantics<parallel>], iteration_bounds = array<i64: 1>, scalar_prefetch = 0 : i64, scratch_operands = 0 : i64, tpu.core_type = #tpu.core_type<tc>, window_params = [{transform_indices = @transform_0, window_bounds = array<i64: 16, 128>}, {pipeline_mode = #tpu.pipeline_mode<synchronous>, transform_indices = @transform_1, window_bounds = array<i64: 128, 256>}, {pipeline_mode = #tpu.pipeline_mode<synchronous>, transform_indices = @transform_2, window_bounds = array<i64: 1, 256>}, {pipeline_mode = #tpu.pipeline_mode<synchronous>, transform_indices = @transform_3, window_bounds = array<i64: 256, 256>}, {pipeline_mode = #tpu.pipeline_mode<synchronous>, transform_indices = @transform_4, window_bounds = array<i64: 1, 256>}, {pipeline_mode = #tpu.pipeline_mode<synchronous>, transform_indices = @transform_5, window_bounds = array<i64: 256, 256>}, {pipeline_mode = #tpu.pipeline_mode<synchronous>, transform_indices = @transform_6, window_bounds = array<i64: 1, 256>}, {transform_indices = @transform_7, window_bounds = array<i64: 16, 256>}]} {
    %c0 = arith.constant 0 : index
    %c0_0 = arith.constant 0 : index
    %0 = vector.load %arg1[%c0, %c0_0] : memref<16x128xf32, #tpu.memory_space<vmem>>, vector<16x128xf32>
    %c0_1 = arith.constant 0 : index
    %c0_2 = arith.constant 0 : index
    %1 = vector.load %arg2[%c0_1, %c0_2] : memref<128x256xf32, #tpu.memory_space<vmem>>, vector<128x256xf32>
    %cst = arith.constant dense<0.000000e+00> : vector<16x256xf32>
    %2 = tpu.matmul %0, %1, %cst {dimension_numbers = #tpu.dot_dimension_numbers<[1], [0], [0], [1], [0, 0, 1, 1], [], []>} : vector<16x128xf32>, vector<128x256xf32>, vector<16x256xf32> -> vector<16x256xf32>
    %c0_3 = arith.constant 0 : index
    %c0_4 = arith.constant 0 : index
    %3 = vector.load %arg3[%c0_3, %c0_4] : memref<1x256xf32, #tpu.memory_space<vmem>>, vector<1x256xf32>
    %4 = vector.broadcast %3 : vector<1x256xf32> to vector<16x256xf32>
    %5 = arith.addf %2, %4 : vector<16x256xf32>
    %cst_5 = arith.constant 0.000000e+00 : f32
    %6 = vector.broadcast %cst_5 : f32 to vector<16x256xf32>
    %7 = arith.maximumf %5, %6 : vector<16x256xf32>
    %c0_6 = arith.constant 0 : index
    %c0_7 = arith.constant 0 : index
    %8 = vector.load %arg4[%c0_6, %c0_7] : memref<256x256xf32, #tpu.memory_space<vmem>>, vector<256x256xf32>
    %cst_8 = arith.constant dense<0.000000e+00> : vector<16x256xf32>
    %9 = tpu.matmul %7, %8, %cst_8 {dimension_numbers = #tpu.dot_dimension_numbers<[1], [0], [0], [1], [0, 0, 1, 1], [], []>} : vector<16x256xf32>, vector<256x256xf32>, vector<16x256xf32> -> vector<16x256xf32>
    %c0_9 = arith.constant 0 : index
    %c0_10 = arith.constant 0 : index
    %10 = vector.load %arg5[%c0_9, %c0_10] : memref<1x256xf32, #tpu.memory_space<vmem>>, vector<1x256xf32>
    %11 = vector.broadcast %10 : vector<1x256xf32> to vector<16x256xf32>
    %12 = arith.addf %9, %11 : vector<16x256xf32>
    %cst_11 = arith.constant 0.000000e+00 : f32
    %13 = vector.broadcast %cst_11 : f32 to vector<16x256xf32>
    %14 = arith.maximumf %12, %13 : vector<16x256xf32>
    %c0_12 = arith.constant 0 : index
    %c0_13 = arith.constant 0 : index
    %15 = vector.load %arg6[%c0_12, %c0_13] : memref<256x256xf32, #tpu.memory_space<vmem>>, vector<256x256xf32>
    %cst_14 = arith.constant dense<0.000000e+00> : vector<16x256xf32>
    %16 = tpu.matmul %14, %15, %cst_14 {dimension_numbers = #tpu.dot_dimension_numbers<[1], [0], [0], [1], [0, 0, 1, 1], [], []>} : vector<16x256xf32>, vector<256x256xf32>, vector<16x256xf32> -> vector<16x256xf32>
    %c0_15 = arith.constant 0 : index
    %c0_16 = arith.constant 0 : index
    %17 = vector.load %arg7[%c0_15, %c0_16] : memref<1x256xf32, #tpu.memory_space<vmem>>, vector<1x256xf32>
    %18 = vector.broadcast %17 : vector<1x256xf32> to vector<16x256xf32>
    %19 = arith.addf %16, %18 : vector<16x256xf32>
    %20 = math.tanh %19 : vector<16x256xf32>
    %c0_17 = arith.constant 0 : index
    %c0_18 = arith.constant 0 : index
    %21 = vector.load %arg8[%c0_17, %c0_18] : memref<16x256xf32, #tpu.memory_space<vmem>>, vector<16x256xf32>
    tpu.vector_store %arg8[%c0_17, %c0_18], %20 {strides = array<i32>} : memref<16x256xf32, #tpu.memory_space<vmem>>, vector<16x256xf32>,
    return
  }
  func.func @transform_0(%arg0: i32) -> (i32, i32) {
    %c0_i32 = arith.constant 0 : i32
    %c0_i32_0 = arith.constant 0 : i32
    return %arg0, %c0_i32 : i32, i32
  }
  func.func @transform_1(%arg0: i32) -> (i32, i32) {
    %c0_i32 = arith.constant 0 : i32
    %c0_i32_0 = arith.constant 0 : i32
    %c0_i32_1 = arith.constant 0 : i32
    return %c0_i32, %c0_i32_0 : i32, i32
  }
  func.func @transform_2(%arg0: i32) -> (i32, i32) {
    %c0_i32 = arith.constant 0 : i32
    %c0_i32_0 = arith.constant 0 : i32
    %c0_i32_1 = arith.constant 0 : i32
    return %c0_i32, %c0_i32_0 : i32, i32
  }
  func.func @transform_3(%arg0: i32) -> (i32, i32) {
    %c0_i32 = arith.constant 0 : i32
    %c0_i32_0 = arith.constant 0 : i32
    %c0_i32_1 = arith.constant 0 : i32
    return %c0_i32, %c0_i32_0 : i32, i32
  }
  func.func @transform_4(%arg0: i32) -> (i32, i32) {
    %c0_i32 = arith.constant 0 : i32
    %c0_i32_0 = arith.constant 0 : i32
    %c0_i32_1 = arith.constant 0 : i32
    return %c0_i32, %c0_i32_0 : i32, i32
  }
  func.func @transform_5(%arg0: i32) -> (i32, i32) {
    %c0_i32 = arith.constant 0 : i32
    %c0_i32_0 = arith.constant 0 : i32
    %c0_i32_1 = arith.constant 0 : i32
    return %c0_i32, %c0_i32_0 : i32, i32
  }
  func.func @transform_6(%arg0: i32) -> (i32, i32) {
    %c0_i32 = arith.constant 0 : i32
    %c0_i32_0 = arith.constant 0 : i32
    %c0_i32_1 = arith.constant 0 : i32
    return %c0_i32, %c0_i32_0 : i32, i32
  }
  func.func @transform_7(%arg0: i32) -> (i32, i32) {
    %c0_i32 = arith.constant 0 : i32
    %c0_i32_0 = arith.constant 0 : i32
    return %arg0, %c0_i32 : i32, i32
  }
}

</mosaic_0001>

<llo_original>
// kernel: tpu_custom_call.1
$region0: #{tpu_custom_call.1}
  #allocation0 [shape = 'u32[]', space=smem, size = 0x4, offset = 0x4, fixed_abs, tag = 'smem constant byte address 0x4 - core index']
  #allocation1 [shape = 'u32[144,128]{1,0:T(1,128)}', space=vmem, size = 0x12000, scoped, tag = 'internal scratch']
  %s0 = inlined_call_operand.hbm [shape: f32[16,128], index: 0, kind: input, shape index: {}]
  %s1 = inlined_call_operand.hbm [shape: f32[128,256], index: 1, kind: input, shape index: {}]
  %s2 = inlined_call_operand.vmem [shape: f32[1,256], index: 2, kind: input, shape index: {}]
  %s3 = inlined_call_operand.hbm [shape: f32[256,256], index: 3, kind: input, shape index: {}]
  %s4 = inlined_call_operand.vmem [shape: f32[1,256], index: 4, kind: input, shape index: {}]
  %s5 = inlined_call_operand.hbm [shape: f32[256,256], index: 5, kind: input, shape index: {}]
  %s6 = inlined_call_operand.vmem [shape: f32[1,256], index: 6, kind: input, shape index: {}]
  %s7 = inlined_call_operand.hbm [shape: f32[16,256], index: 7, kind: output, shape index: {}]
  %s8 = sld [smem:[#allocation0]]
  $region54: #{tpu_custom_call.1} parent=0
    _
  %s10 = ssub.s32 1, %s8
  %s11 = scalar_select 0, %s10, %s8
  $region1: #{tpu_custom_call.1} parent=0
    #allocation2 [shape = 'u8[8192]{0}', space=vmem, size = 0x2000, scoped, tag = 'input window, operand 0, single buffered']
    #allocation3 [shape = 's32[1]{0}', space=sflag, size = 0x4, scoped, tag = 'scoped memory for tpu_custom_call.1']
    #allocation4 [shape = 's32[1]{0}', space=sflag, size = 0x4, scoped, tag = 'scoped memory for tpu_custom_call.1']
    #allocation5 [shape = 'u8[131072]{0}', space=vmem, size = 0x20000, scoped, tag = 'input window, operand 1, single buffered']
    #allocation6 [shape = 's32[1]{0}', space=sflag, size = 0x4, scoped, tag = 'scoped memory for tpu_custom_call.1']
    #allocation7 [shape = 'u8[262144]{0}', space=vmem, size = 0x40000, scoped, tag = 'input window, operand 3, single buffered']
    #allocation8 [shape = 'u8[262144]{0}', space=vmem, size = 0x40000, scoped, tag = 'input window, operand 5, single buffered']
    #allocation9 [shape = 's32[1]{0}', space=sflag, size = 0x4, scoped, tag = 'scoped memory for tpu_custom_call.1']
    #allocation10 [shape = 'u8[16384]{0}', space=vmem, size = 0x4000, scoped, tag = 'output window, operand 0, single buffered']
    %12 = vsyncpa [#allocation3], 0
    %13 = vsyncpa [#allocation6], 0
    %14 = vsyncpa [#allocation9], 0
    %15 = vsyncpa [#allocation4], 0
    // Predicated region
    $region2: #{tpu_custom_call.1} parent=1 // pred_check
      _
    $region3: #{tpu_custom_call.1} parent=1 // pred_check_branch
      %17 = sbr.rel (0) target = $region5
    $region4: #{tpu_custom_call.1} parent=1 // pred_region
      %s19 = ssub.s32 256, 256
      %20 = vsyncadd [#allocation3], %s19
      %s21 = sshll.u32 [#allocation2], 4
      %s22 = int_to_ptr.vmem [resolvable:$true] %s21
      %27 = dma.hbm_to_vmem [thread:$0]  %s0, 256, %s22, [#allocation3], 128, 128, 8
    $region5: #{tpu_custom_call.1} parent=1 // pred_fallthru
      _
    // Predicated region
    $region6: #{tpu_custom_call.1} parent=1 // pred_check
      _
    $region7: #{tpu_custom_call.1} parent=1 // pred_check_branch
      %29 = sbr.rel (0) target = $region9
    $region8: #{tpu_custom_call.1} parent=1 // pred_region
      %s31 = ssub.s32 4096, 4096
      %32 = vsyncadd [#allocation6], %s31
      %s33 = sshll.u32 [#allocation5], 4
      %s34 = int_to_ptr.vmem [resolvable:$true] %s33
      %39 = dma.hbm_to_vmem [thread:$0]  %s1, 4096, %s34, [#allocation6], 256, 256, 16
    $region9: #{tpu_custom_call.1} parent=1 // pred_fallthru
      _
    // Predicated region
    $region10: #{tpu_custom_call.1} parent=1 // pred_check
      _
    $region11: #{tpu_custom_call.1} parent=1 // pred_check_branch
      %41 = sbr.rel (0) target = $region13
    $region12: #{tpu_custom_call.1} parent=1 // pred_region
      _
    $region13: #{tpu_custom_call.1} parent=1 // pred_fallthru
      _
    // Predicated region
    $region14: #{tpu_custom_call.1} parent=1 // pred_check
      _
    $region15: #{tpu_custom_call.1} parent=1 // pred_check_branch
      %43 = sbr.rel (0) target = $region17
    $region16: #{tpu_custom_call.1} parent=1 // pred_region
      %s45 = ssub.s32 8192, 8192
      %46 = vsyncadd [#allocation6], %s45
      %s47 = sshll.u32 [#allocation7], 4
      %s48 = int_to_ptr.vmem [resolvable:$true] %s47
      %53 = dma.hbm_to_vmem [thread:$0]  %s3, 8192, %s48, [#allocation6], 256, 256, 16
    $region17: #{tpu_custom_call.1} parent=1 // pred_fallthru
      _
    // Predicated region
    $region18: #{tpu_custom_call.1} parent=1 // pred_check
      _
    $region19: #{tpu_custom_call.1} parent=1 // pred_check_branch
      %55 = sbr.rel (0) target = $region21
    $region20: #{tpu_custom_call.1} parent=1 // pred_region
      _
    $region21: #{tpu_custom_call.1} parent=1 // pred_fallthru
      _
    // Predicated region
    $region22: #{tpu_custom_call.1} parent=1 // pred_check
      _
    $region23: #{tpu_custom_call.1} parent=1 // pred_check_branch
      %57 = sbr.rel (0) target = $region25
    $region24: #{tpu_custom_call.1} parent=1 // pred_region
      %s59 = ssub.s32 8192, 8192
      %60 = vsyncadd [#allocation9], %s59
      %s61 = sshll.u32 [#allocation8], 4
      %s62 = int_to_ptr.vmem [resolvable:$true] %s61
      %67 = dma.hbm_to_vmem [thread:$0]  %s5, 8192, %s62, [#allocation9], 256, 256, 16
    $region25: #{tpu_custom_call.1} parent=1 // pred_fallthru
      _
    // Predicated region
    $region26: #{tpu_custom_call.1} parent=1 // pred_check
      _
    $region27: #{tpu_custom_call.1} parent=1 // pred_check_branch
      %69 = sbr.rel (0) target = $region29
    $region28: #{tpu_custom_call.1} parent=1 // pred_region
      _
    $region29: #{tpu_custom_call.1} parent=1 // pred_fallthru
      _
    // Predicated region
    $region30: #{tpu_custom_call.1} parent=1 // pred_check
      _
    $region31: #{tpu_custom_call.1} parent=1 // pred_check_branch
      %71 = sbr.rel (0) target = $region33
    $region32: #{tpu_custom_call.1} parent=1 // pred_region
      %72 = dma.done [#allocation3], 256
    $region33: #{tpu_custom_call.1} parent=1 // pred_fallthru
      _
    // Predicated region
    $region34: #{tpu_custom_call.1} parent=1 // pred_check
      _
    $region35: #{tpu_custom_call.1} parent=1 // pred_check_branch
      %74 = sbr.rel (0) target = $region37
    $region36: #{tpu_custom_call.1} parent=1 // pred_region
      %75 = dma.done [#allocation6], 4096
    $region37: #{tpu_custom_call.1} parent=1 // pred_fallthru
      _
    // Predicated region
    $region38: #{tpu_custom_call.1} parent=1 // pred_check
      _
    $region39: #{tpu_custom_call.1} parent=1 // pred_check_branch
      %77 = sbr.rel (0) target = $region41
    $region40: #{tpu_custom_call.1} parent=1 // pred_region
      %78 = dma.done [#allocation6], 8192
    $region41: #{tpu_custom_call.1} parent=1 // pred_fallthru
      _
    // Predicated region
    $region42: #{tpu_custom_call.1} parent=1 // pred_check
      _
    $region43: #{tpu_custom_call.1} parent=1 // pred_check_branch
      %80 = sbr.rel (0) target = $region45
    $region44: #{tpu_custom_call.1} parent=1 // pred_region
      %81 = dma.done [#allocation9], 8192
    $region45: #{tpu_custom_call.1} parent=1 // pred_fallthru
      _
    %v82 = vld [vmem:[#allocation2] sm:$0xff]
    %v83 = vld [vmem:[#allocation2 + $0x8] sm:$0xff]
    %v84 = vld [vmem:[#allocation5] sm:$0xff]
    %v85 = vld [vmem:[#allocation5 + $0x8] sm:$0xff]
    %v86 = vld [vmem:[#allocation5 + $0x10] sm:$0xff]
    %v87 = vld [vmem:[#allocation5 + $0x18] sm:$0xff]
    %v88 = vld [vmem:[#allocation5 + $0x20] sm:$0xff]
    %v89 = vld [vmem:[#allocation5 + $0x28] sm:$0xff]
    %v90 = vld [vmem:[#allocation5 + $0x30] sm:$0xff]
    %v91 = vld [vmem:[#allocation5 + $0x38] sm:$0xff]
    %v92 = vld [vmem:[#allocation5 + $0x40] sm:$0xff]
    %v93 = vld [vmem:[#allocation5 + $0x48] sm:$0xff]
    %v94 = vld [vmem:[#allocation5 + $0x50] sm:$0xff]
    %v95 = vld [vmem:[#allocation5 + $0x58] sm:$0xff]
    %v96 = vld [vmem:[#allocation5 + $0x60] sm:$0xff]
    %v97 = vld [vmem:[#allocation5 + $0x68] sm:$0xff]
    %v98 = vld [vmem:[#allocation5 + $0x70] sm:$0xff]
    %v99 = vld [vmem:[#allocation5 + $0x78] sm:$0xff]
    %v100 = vld [vmem:[#allocation5 + $0x80] sm:$0xff]
    %v101 = vld [vmem:[#allocation5 + $0x88] sm:$0xff]
    %v102 = vld [vmem:[#allocation5 + $0x90] sm:$0xff]
    %v103 = vld [vmem:[#allocation5 + $0x98] sm:$0xff]
    %v104 = vld [vmem:[#allocation5 + $0xa0] sm:$0xff]
    %v105 = vld [vmem:[#allocation5 + $0xa8] sm:$0xff]
    %v106 = vld [vmem:[#allocation5 + $0xb0] sm:$0xff]
    %v107 = vld [vmem:[#allocation5 + $0xb8] sm:$0xff]
    %v108 = vld [vmem:[#allocation5 + $0xc0] sm:$0xff]
    %v109 = vld [vmem:[#allocation5 + $0xc8] sm:$0xff]
    %v110 = vld [vmem:[#allocation5 + $0xd0] sm:$0xff]
    %v111 = vld [vmem:[#allocation5 + $0xd8] sm:$0xff]
    %v112 = vld [vmem:[#allocation5 + $0xe0] sm:$0xff]
    %v113 = vld [vmem:[#allocation5 + $0xe8] sm:$0xff]
    %v114 = vld [vmem:[#allocation5 + $0xf0] sm:$0xff]
    %v115 = vld [vmem:[#allocation5 + $0xf8] sm:$0xff]
    %v116 = vld [vmem:[%s2] sm:$0x3]
    %v118 = vlaneseq
    %v119 = vshrl.u32 %v118, 7
    %v120 = vsub.s32 0, %v119
    %v121 = vrot.slane %v116, %v120
    %v122 = vlaneseq
    %v123 = vshrl.u32 %v122, 7
    %v124 = vsub.s32 1, %v123
    %v125 = vrot.slane %v116, %v124
    %128 = vmatprep.subr.mxu0 %v115
    %129 = vmatpush1.msra.mxu0 %v114
    %130 = vmatprep.subr.mxu0 %v113
    %131 = vmatpush1.msra.mxu0 %v112
    %132 = vmatprep.subr.mxu0 %v111
    %133 = vmatpush1.msra.mxu0 %v110
    %134 = vmatprep.subr.mxu0 %v109
    %135 = vmatpush1.msra.mxu0 %v108
    %136 = vmatprep.subr.mxu0 %v107
    %137 = vmatpush1.msra.mxu0 %v106
    %138 = vmatprep.subr.mxu0 %v105
    %139 = vmatpush1.msra.mxu0 %v104
    %140 = vmatprep.subr.mxu0 %v103
    %141 = vmatpush1.msra.mxu0 %v102
    %142 = vmatprep.subr.mxu0 %v101
    %143 = vmatpush1.msra.mxu0 %v100
    %144 = vmatprep.subr.mxu0 %v99
    %145 = vmatpush1.msra.mxu0 %v98
    %146 = vmatprep.subr.mxu0 %v97
    %147 = vmatpush1.msra.mxu0 %v96
    %148 = vmatprep.subr.mxu0 %v95
    %149 = vmatpush1.msra.mxu0 %v94
    %150 = vmatprep.subr.mxu0 %v93
    %151 = vmatpush1.msra.mxu0 %v92
    %152 = vmatprep.subr.mxu0 %v91
    %153 = vmatpush1.msra.mxu0 %v90
    %154 = vmatprep.subr.mxu0 %v89
    %155 = vmatpush1.msra.mxu0 %v88
    %156 = vmatprep.subr.mxu0 %v87
    %157 = vmatpush1.msra.mxu0 %v86
    %158 = vmatprep.subr.mxu0 %v85
    %159 = vmatpush1.msra.mxu0 %v84
    %160 = vmatprep.subr.mxu0 0.0
    %161 = vmatpush2.msra.mxu0 0.0
    %162 = vmatprep.subr.mxu0 0.0
    %163 = vmatpush2.msra.mxu0 0.0
    %164 = vmatprep.subr.mxu0 0.0
    %165 = vmatpush2.msra.mxu0 0.0
    %166 = vmatprep.subr.mxu0 0.0
    %167 = vmatpush2.msra.mxu0 0.0
    %168 = vmatprep.subr.mxu0 0.0
    %169 = vmatpush2.msra.mxu0 0.0
    %170 = vmatprep.subr.mxu0 0.0
    %171 = vmatpush2.msra.mxu0 0.0
    %172 = vmatprep.subr.mxu0 0.0
    %173 = vmatpush2.msra.mxu0 0.0
    %174 = vmatprep.subr.mxu0 0.0
    %175 = vmatpush2.msra.mxu0 0.0
    %176 = vmatprep.subr.mxu0 0.0
    %177 = vmatpush2.msra.mxu0 0.0
    %178 = vmatprep.subr.mxu0 0.0
    %179 = vmatpush2.msra.mxu0 0.0
    %180 = vmatprep.subr.mxu0 0.0
    %181 = vmatpush2.msra.mxu0 0.0
    %182 = vmatprep.subr.mxu0 0.0
    %183 = vmatpush2.msra.mxu0 0.0
    %184 = vmatprep.subr.mxu0 0.0
    %185 = vmatpush2.msra.mxu0 0.0
    %186 = vmatprep.subr.mxu0 0.0
    %187 = vmatpush2.msra.mxu0 0.0
    %188 = vmatprep.subr.mxu0 0.0
    %189 = vmatpush2.msra.mxu0 0.0
    %190 = vmatprep.subr.mxu0 0.0
    %191 = vmatpush2.msra.mxu0 0.0
    %192 = vmatprep.mubr.f32.mxu0 0.0
    %193 = vmatmul.mubr.f32.gmra.mxu0 %v82
    %v194 = vpop.f32.mrf.mxu0
    %v195 = vadd.f32 %v121, %v194
    %v196 = vpop.f32.mrf.mxu0
    %v197 = vadd.f32 %v125, %v196
    %198 = vmatprep.mubr.f32.mxu0 0.0
    %199 = vmatmul.mubr.f32.gmra.mxu0 %v83
    %v200 = vpop.f32.mrf.mxu0
    %v201 = vadd.f32 %v121, %v200
    %v202 = vpop.f32.mrf.mxu0
    %v203 = vadd.f32 %v125, %v202
    %204 = vdwg.mxu0
    %v205 = vmax.f32 %v195, 0.0
    %v206 = vmax.f32 %v197, 0.0
    %v207 = vmax.f32 %v201, 0.0
    %v208 = vmax.f32 %v203, 0.0
    %v209 = vld [vmem:[#allocation7] sm:$0xff]
    %v210 = vld [vmem:[#allocation7 + $0x8] sm:$0xff]
    %v211 = vld [vmem:[#allocation7 + $0x10] sm:$0xff]
    %v212 = vld [vmem:[#allocation7 + $0x18] sm:$0xff]
    %v213 = vld [vmem:[#allocation7 + $0x20] sm:$0xff]
    %v214 = vld [vmem:[#allocation7 + $0x28] sm:$0xff]
    %v215 = vld [vmem:[#allocation7 + $0x30] sm:$0xff]
    %v216 = vld [vmem:[#allocation7 + $0x38] sm:$0xff]
    %v217 = vld [vmem:[#allocation7 + $0x40] sm:$0xff]
    %v218 = vld [vmem:[#allocation7 + $0x48] sm:$0xff]
    %v219 = vld [vmem:[#allocation7 + $0x50] sm:$0xff]
    %v220 = vld [vmem:[#allocation7 + $0x58] sm:$0xff]
    %v221 = vld [vmem:[#allocation7 + $0x60] sm:$0xff]
    %v222 = vld [vmem:[#allocation7 + $0x68] sm:$0xff]
    %v223 = vld [vmem:[#allocation7 + $0x70] sm:$0xff]
    %v224 = vld [vmem:[#allocation7 + $0x78] sm:$0xff]
    %v225 = vld [vmem:[#allocation7 + $0x80] sm:$0xff]
    %v226 = vld [vmem:[#allocation7 + $0x88] sm:$0xff]
    %v227 = vld [vmem:[#allocation7 + $0x90] sm:$0xff]
    %v228 = vld [vmem:[#allocation7 + $0x98] sm:$0xff]
    %v229 = vld [vmem:[#allocation7 + $0xa0] sm:$0xff]
    %v230 = vld [vmem:[#allocation7 + $0xa8] sm:$0xff]
    %v231 = vld [vmem:[#allocation7 + $0xb0] sm:$0xff]
    %v232 = vld [vmem:[#allocation7 + $0xb8] sm:$0xff]
    %v233 = vld [vmem:[#allocation7 + $0xc0] sm:$0xff]
    %v234 = vld [vmem:[#allocation7 + $0xc8] sm:$0xff]
    %v235 = vld [vmem:[#allocation7 + $0xd0] sm:$0xff]
    %v236 = vld [vmem:[#allocation7 + $0xd8] sm:$0xff]
    %v237 = vld [vmem:[#allocation7 + $0xe0] sm:$0xff]
    %v238 = vld [vmem:[#allocation7 + $0xe8] sm:$0xff]
    %v239 = vld [vmem:[#allocation7 + $0xf0] sm:$0xff]
    %v240 = vld [vmem:[#allocation7 + $0xf8] sm:$0xff]
    %v241 = vld [vmem:[#allocation7 + $0x100] sm:$0xff]
    %v242 = vld [vmem:[#allocation7 + $0x108] sm:$0xff]
    %v243 = vld [vmem:[#allocation7 + $0x110] sm:$0xff]
    %v244 = vld [vmem:[#allocation7 + $0x118] sm:$0xff]
    %v245 = vld [vmem:[#allocation7 + $0x120] sm:$0xff]
    %v246 = vld [vmem:[#allocation7 + $0x128] sm:$0xff]
    %v247 = vld [vmem:[#allocation7 + $0x130] sm:$0xff]
    %v248 = vld [vmem:[#allocation7 + $0x138] sm:$0xff]
    %v249 = vld [vmem:[#allocation7 + $0x140] sm:$0xff]
    %v250 = vld [vmem:[#allocation7 + $0x148] sm:$0xff]
    %v251 = vld [vmem:[#allocation7 + $0x150] sm:$0xff]
    %v252 = vld [vmem:[#allocation7 + $0x158] sm:$0xff]
    %v253 = vld [vmem:[#allocation7 + $0x160] sm:$0xff]
    %v254 = vld [vmem:[#allocation7 + $0x168] sm:$0xff]
    %v255 = vld [vmem:[#allocation7 + $0x170] sm:$0xff]
    %v256 = vld [vmem:[#allocation7 + $0x178] sm:$0xff]
    %v257 = vld [vmem:[#allocation7 + $0x180] sm:$0xff]
    %v258 = vld [vmem:[#allocation7 + $0x188] sm:$0xff]
    %v259 = vld [vmem:[#allocation7 + $0x190] sm:$0xff]
    %v260 = vld [vmem:[#allocation7 + $0x198] sm:$0xff]
    %v261 = vld [vmem:[#allocation7 + $0x1a0] sm:$0xff]
    %v262 = vld [vmem:[#allocation7 + $0x1a8] sm:$0xff]
    %v263 = vld [vmem:[#allocation7 + $0x1b0] sm:$0xff]
    %v264 = vld [vmem:[#allocation7 + $0x1b8] sm:$0xff]
    %v265 = vld [vmem:[#allocation7 + $0x1c0] sm:$0xff]
    %v266 = vld [vmem:[#allocation7 + $0x1c8] sm:$0xff]
    %v267 = vld [vmem:[#allocation7 + $0x1d0] sm:$0xff]
    %v268 = vld [vmem:[#allocation7 + $0x1d8] sm:$0xff]
    %v269 = vld [vmem:[#allocation7 + $0x1e0] sm:$0xff]
    %v270 = vld [vmem:[#allocation7 + $0x1e8] sm:$0xff]
    %v271 = vld [vmem:[#allocation7 + $0x1f0] sm:$0xff]
    %v272 = vld [vmem:[#allocation7 + $0x1f8] sm:$0xff]
    %v273 = vld [vmem:[%s4] sm:$0x3]
    %v275 = vlaneseq
    %v276 = vshrl.u32 %v275, 7
    %v277 = vsub.s32 0, %v276
    %v278 = vrot.slane %v273, %v277
    %v279 = vlaneseq
    %v280 = vshrl.u32 %v279, 7
    %v281 = vsub.s32 1, %v280
    %v282 = vrot.slane %v273, %v281
    %285 = vmatprep.subr.mxu0 %v240
    %286 = vmatpush1.msra.mxu0 %v239
    %287 = vmatprep.subr.mxu0 %v238
    %288 = vmatpush1.msra.mxu0 %v237
    %289 = vmatprep.subr.mxu0 %v236
    %290 = vmatpush1.msra.mxu0 %v235
    %291 = vmatprep.subr.mxu0 %v234
    %292 = vmatpush1.msra.mxu0 %v233
    %293 = vmatprep.subr.mxu0 %v232
    %294 = vmatpush1.msra.mxu0 %v231
    %295 = vmatprep.subr.mxu0 %v230
    %296 = vmatpush1.msra.mxu0 %v229
    %297 = vmatprep.subr.mxu0 %v228
    %298 = vmatpush1.msra.mxu0 %v227
    %299 = vmatprep.subr.mxu0 %v226
    %300 = vmatpush1.msra.mxu0 %v225
    %301 = vmatprep.subr.mxu0 %v224
    %302 = vmatpush1.msra.mxu0 %v223
    %303 = vmatprep.subr.mxu0 %v222
    %304 = vmatpush1.msra.mxu0 %v221
    %305 = vmatprep.subr.mxu0 %v220
    %306 = vmatpush1.msra.mxu0 %v219
    %307 = vmatprep.subr.mxu0 %v218
    %308 = vmatpush1.msra.mxu0 %v217
    %309 = vmatprep.subr.mxu0 %v216
    %310 = vmatpush1.msra.mxu0 %v215
    %311 = vmatprep.subr.mxu0 %v214
    %312 = vmatpush1.msra.mxu0 %v213
    %313 = vmatprep.subr.mxu0 %v212
    %314 = vmatpush1.msra.mxu0 %v211
    %315 = vmatprep.subr.mxu0 %v210
    %316 = vmatpush1.msra.mxu0 %v209
    %317 = vmatprep.subr.mxu0 %v272
    %318 = vmatpush2.msra.mxu0 %v271
    %319 = vmatprep.subr.mxu0 %v270
    %320 = vmatpush2.msra.mxu0 %v269
    %321 = vmatprep.subr.mxu0 %v268
    %322 = vmatpush2.msra.mxu0 %v267
    %323 = vmatprep.subr.mxu0 %v266
    %324 = vmatpush2.msra.mxu0 %v265
    %325 = vmatprep.subr.mxu0 %v264
    %326 = vmatpush2.msra.mxu0 %v263
    %327 = vmatprep.subr.mxu0 %v262
    %328 = vmatpush2.msra.mxu0 %v261
    %329 = vmatprep.subr.mxu0 %v260
    %330 = vmatpush2.msra.mxu0 %v259
    %331 = vmatprep.subr.mxu0 %v258
    %332 = vmatpush2.msra.mxu0 %v257
    %333 = vmatprep.subr.mxu0 %v256
    %334 = vmatpush2.msra.mxu0 %v255
    %335 = vmatprep.subr.mxu0 %v254
    %336 = vmatpush2.msra.mxu0 %v253
    %337 = vmatprep.subr.mxu0 %v252
    %338 = vmatpush2.msra.mxu0 %v251
    %339 = vmatprep.subr.mxu0 %v250
    %340 = vmatpush2.msra.mxu0 %v249
    %341 = vmatprep.subr.mxu0 %v248
    %342 = vmatpush2.msra.mxu0 %v247
    %343 = vmatprep.subr.mxu0 %v246
    %344 = vmatpush2.msra.mxu0 %v245
    %345 = vmatprep.subr.mxu0 %v244
    %346 = vmatpush2.msra.mxu0 %v243
    %347 = vmatprep.subr.mxu0 %v242
    %348 = vmatpush2.msra.mxu0 %v241
    %349 = vmatprep.mubr.f32.mxu0 %v206
    %350 = vmatmul.mubr.f32.gmra.mxu0 %v205
    %v351 = vpop.f32.mrf.mxu0
    %v352 = vadd.f32 %v278, %v351
    %v353 = vpop.f32.mrf.mxu0
    %v354 = vadd.f32 %v282, %v353
    %355 = vmatprep.mubr.f32.mxu0 %v208
    %356 = vmatmul.mubr.f32.gmra.mxu0 %v207
    %v357 = vpop.f32.mrf.mxu0
    %v358 = vadd.f32 %v278, %v357
    %v359 = vpop.f32.mrf.mxu0
    %v360 = vadd.f32 %v282, %v359
    %361 = vdwg.mxu0
    %v362 = vmax.f32 %v352, 0.0
    %v363 = vmax.f32 %v354, 0.0
    %v364 = vmax.f32 %v358, 0.0
    %v365 = vmax.f32 %v360, 0.0
    %v366 = vld [vmem:[#allocation8] sm:$0xff]
    %v367 = vld [vmem:[#allocation8 + $0x8] sm:$0xff]
    %v368 = vld [vmem:[#allocation8 + $0x10] sm:$0xff]
    %v369 = vld [vmem:[#allocation8 + $0x18] sm:$0xff]
    %v370 = vld [vmem:[#allocation8 + $0x20] sm:$0xff]
    %v371 = vld [vmem:[#allocation8 + $0x28] sm:$0xff]
    %v372 = vld [vmem:[#allocation8 + $0x30] sm:$0xff]
    %v373 = vld [vmem:[#allocation8 + $0x38] sm:$0xff]
    %v374 = vld [vmem:[#allocation8 + $0x40] sm:$0xff]
    %v375 = vld [vmem:[#allocation8 + $0x48] sm:$0xff]
    %v376 = vld [vmem:[#allocation8 + $0x50] sm:$0xff]
    %v377 = vld [vmem:[#allocation8 + $0x58] sm:$0xff]
    %v378 = vld [vmem:[#allocation8 + $0x60] sm:$0xff]
    %v379 = vld [vmem:[#allocation8 + $0x68] sm:$0xff]
    %v380 = vld [vmem:[#allocation8 + $0x70] sm:$0xff]
    %v381 = vld [vmem:[#allocation8 + $0x78] sm:$0xff]
    %v382 = vld [vmem:[#allocation8 + $0x80] sm:$0xff]
    %v383 = vld [vmem:[#allocation8 + $0x88] sm:$0xff]
    %v384 = vld [vmem:[#allocation8 + $0x90] sm:$0xff]
    %v385 = vld [vmem:[#allocation8 + $0x98] sm:$0xff]
    %v386 = vld [vmem:[#allocation8 + $0xa0] sm:$0xff]
    %v387 = vld [vmem:[#allocation8 + $0xa8] sm:$0xff]
    %v388 = vld [vmem:[#allocation8 + $0xb0] sm:$0xff]
    %v389 = vld [vmem:[#allocation8 + $0xb8] sm:$0xff]
    %v390 = vld [vmem:[#allocation8 + $0xc0] sm:$0xff]
    %v391 = vld [vmem:[#allocation8 + $0xc8] sm:$0xff]
    %v392 = vld [vmem:[#allocation8 + $0xd0] sm:$0xff]
    %v393 = vld [vmem:[#allocation8 + $0xd8] sm:$0xff]
    %v394 = vld [vmem:[#allocation8 + $0xe0] sm:$0xff]
    %v395 = vld [vmem:[#allocation8 + $0xe8] sm:$0xff]
    %v396 = vld [vmem:[#allocation8 + $0xf0] sm:$0xff]
    %v397 = vld [vmem:[#allocation8 + $0xf8] sm:$0xff]
    %v398 = vld [vmem:[#allocation8 + $0x100] sm:$0xff]
    %v399 = vld [vmem:[#allocation8 + $0x108] sm:$0xff]
    %v400 = vld [vmem:[#allocation8 + $0x110] sm:$0xff]
    %v401 = vld [vmem:[#allocation8 + $0x118] sm:$0xff]
    %v402 = vld [vmem:[#allocation8 + $0x120] sm:$0xff]
    %v403 = vld [vmem:[#allocation8 + $0x128] sm:$0xff]
    %v404 = vld [vmem:[#allocation8 + $0x130] sm:$0xff]
    %v405 = vld [vmem:[#allocation8 + $0x138] sm:$0xff]
    %v406 = vld [vmem:[#allocation8 + $0x140] sm:$0xff]
    %v407 = vld [vmem:[#allocation8 + $0x148] sm:$0xff]
    %v408 = vld [vmem:[#allocation8 + $0x150] sm:$0xff]
    %v409 = vld [vmem:[#allocation8 + $0x158] sm:$0xff]
    %v410 = vld [vmem:[#allocation8 + $0x160] sm:$0xff]
    %v411 = vld [vmem:[#allocation8 + $0x168] sm:$0xff]
    %v412 = vld [vmem:[#allocation8 + $0x170] sm:$0xff]
    %v413 = vld [vmem:[#allocation8 + $0x178] sm:$0xff]
    %v414 = vld [vmem:[#allocation8 + $0x180] sm:$0xff]
    %v415 = vld [vmem:[#allocation8 + $0x188] sm:$0xff]
    %v416 = vld [vmem:[#allocation8 + $0x190] sm:$0xff]
    %v417 = vld [vmem:[#allocation8 + $0x198] sm:$0xff]
    %v418 = vld [vmem:[#allocation8 + $0x1a0] sm:$0xff]
    %v419 = vld [vmem:[#allocation8 + $0x1a8] sm:$0xff]
    %v420 = vld [vmem:[#allocation8 + $0x1b0] sm:$0xff]
    %v421 = vld [vmem:[#allocation8 + $0x1b8] sm:$0xff]
    %v422 = vld [vmem:[#allocation8 + $0x1c0] sm:$0xff]
    %v423 = vld [vmem:[#allocation8 + $0x1c8] sm:$0xff]
    %v424 = vld [vmem:[#allocation8 + $0x1d0] sm:$0xff]
    %v425 = vld [vmem:[#allocation8 + $0x1d8] sm:$0xff]
    %v426 = vld [vmem:[#allocation8 + $0x1e0] sm:$0xff]
    %v427 = vld [vmem:[#allocation8 + $0x1e8] sm:$0xff]
    %v428 = vld [vmem:[#allocation8 + $0x1f0] sm:$0xff]
    %v429 = vld [vmem:[#allocation8 + $0x1f8] sm:$0xff]
    %v430 = vld [vmem:[%s6] sm:$0x3]
    %v432 = vlaneseq
    %v433 = vshrl.u32 %v432, 7
    %v434 = vsub.s32 0, %v433
    %v435 = vrot.slane %v430, %v434
    %v436 = vlaneseq
    %v437 = vshrl.u32 %v436, 7
    %v438 = vsub.s32 1, %v437
    %v439 = vrot.slane %v430, %v438
    %442 = vmatprep.subr.mxu0 %v397
    %443 = vmatpush1.msra.mxu0 %v396
    %444 = vmatprep.subr.mxu0 %v395
    %445 = vmatpush1.msra.mxu0 %v394
    %446 = vmatprep.subr.mxu0 %v393
    %447 = vmatpush1.msra.mxu0 %v392
    %448 = vmatprep.subr.mxu0 %v391
    %449 = vmatpush1.msra.mxu0 %v390
    %450 = vmatprep.subr.mxu0 %v389
    %451 = vmatpush1.msra.mxu0 %v388
    %452 = vmatprep.subr.mxu0 %v387
    %453 = vmatpush1.msra.mxu0 %v386
    %454 = vmatprep.subr.mxu0 %v385
    %455 = vmatpush1.msra.mxu0 %v384
    %456 = vmatprep.subr.mxu0 %v383
    %457 = vmatpush1.msra.mxu0 %v382
    %458 = vmatprep.subr.mxu0 %v381
    %459 = vmatpush1.msra.mxu0 %v380
    %460 = vmatprep.subr.mxu0 %v379
    %461 = vmatpush1.msra.mxu0 %v378
    %462 = vmatprep.subr.mxu0 %v377
    %463 = vmatpush1.msra.mxu0 %v376
    %464 = vmatprep.subr.mxu0 %v375
    %465 = vmatpush1.msra.mxu0 %v374
    %466 = vmatprep.subr.mxu0 %v373
    %467 = vmatpush1.msra.mxu0 %v372
    %468 = vmatprep.subr.mxu0 %v371
    %469 = vmatpush1.msra.mxu0 %v370
    %470 = vmatprep.subr.mxu0 %v369
    %471 = vmatpush1.msra.mxu0 %v368
    %472 = vmatprep.subr.mxu0 %v367
    %473 = vmatpush1.msra.mxu0 %v366
    %474 = vmatprep.subr.mxu0 %v429
    %475 = vmatpush2.msra.mxu0 %v428
    %476 = vmatprep.subr.mxu0 %v427
    %477 = vmatpush2.msra.mxu0 %v426
    %478 = vmatprep.subr.mxu0 %v425
    %479 = vmatpush2.msra.mxu0 %v424
    %480 = vmatprep.subr.mxu0 %v423
    %481 = vmatpush2.msra.mxu0 %v422
    %482 = vmatprep.subr.mxu0 %v421
    %483 = vmatpush2.msra.mxu0 %v420
    %484 = vmatprep.subr.mxu0 %v419
    %485 = vmatpush2.msra.mxu0 %v418
    %486 = vmatprep.subr.mxu0 %v417
    %487 = vmatpush2.msra.mxu0 %v416
    %488 = vmatprep.subr.mxu0 %v415
    %489 = vmatpush2.msra.mxu0 %v414
    %490 = vmatprep.subr.mxu0 %v413
    %491 = vmatpush2.msra.mxu0 %v412
    %492 = vmatprep.subr.mxu0 %v411
    %493 = vmatpush2.msra.mxu0 %v410
    %494 = vmatprep.subr.mxu0 %v409
    %495 = vmatpush2.msra.mxu0 %v408
    %496 = vmatprep.subr.mxu0 %v407
    %497 = vmatpush2.msra.mxu0 %v406
    %498 = vmatprep.subr.mxu0 %v405
    %499 = vmatpush2.msra.mxu0 %v404
    %500 = vmatprep.subr.mxu0 %v403
    %501 = vmatpush2.msra.mxu0 %v402
    %502 = vmatprep.subr.mxu0 %v401
    %503 = vmatpush2.msra.mxu0 %v400
    %504 = vmatprep.subr.mxu0 %v399
    %505 = vmatpush2.msra.mxu0 %v398
    %506 = vmatprep.mubr.f32.mxu0 %v363
    %507 = vmatmul.mubr.f32.gmra.mxu0 %v362
    %v508 = vpop.f32.mrf.mxu0
    %v509 = vadd.f32 %v435, %v508
    %v510 = vpop.f32.mrf.mxu0
    %v511 = vadd.f32 %v439, %v510
    %512 = vmatprep.mubr.f32.mxu0 %v365
    %513 = vmatmul.mubr.f32.gmra.mxu0 %v364
    %v514 = vpop.f32.mrf.mxu0
    %v515 = vadd.f32 %v435, %v514
    %v516 = vpop.f32.mrf.mxu0
    %v517 = vadd.f32 %v439, %v516
    %518 = vdwg.mxu0
    %v519 = vtanh.pop %v509
    %v520 = vtanh.pop %v511
    %v521 = vtanh.pop %v515
    %v522 = vtanh.pop %v517
    %523 = vst [vmem:[#allocation10] sm:$0xff] %v519
    %524 = vst [vmem:[#allocation10 + $0x8] sm:$0xff] %v520
    %525 = vst [vmem:[#allocation10 + $0x10] sm:$0xff] %v521
    %526 = vst [vmem:[#allocation10 + $0x18] sm:$0xff] %v522
    // Predicated region
    $region46: #{tpu_custom_call.1} parent=1 // pred_check
      _
    $region47: #{tpu_custom_call.1} parent=1 // pred_check_branch
      %528 = sbr.rel (0) target = $region49
    $region48: #{tpu_custom_call.1} parent=1 // pred_region
      %s530 = ssub.s32 512, 512
      %531 = vsyncadd [#allocation4], %s530
      %s532 = sshll.u32 [#allocation10], 4
      %s533 = int_to_ptr.vmem [resolvable:$true] %s532
      %538 = dma.vmem_to_hbm [thread:$0]  %s533, 512, %s7, [#allocation4], 256, 256, 16
    $region49: #{tpu_custom_call.1} parent=1 // pred_fallthru
      _
    // Predicated region
    $region50: #{tpu_custom_call.1} parent=1 // pred_check
      _
    $region51: #{tpu_custom_call.1} parent=1 // pred_check_branch
      %540 = sbr.rel (0) target = $region53
    $region52: #{tpu_custom_call.1} parent=1 // pred_region
      %541 = dma.done [#allocation4], 512
    $region53: #{tpu_custom_call.1} parent=1 // pred_fallthru
      _
    %542 = vsyncpa [#allocation3], 1
    %543 = vsyncpa [#allocation6], 1
    %544 = vsyncpa [#allocation9], 1
    %545 = vsyncpa [#allocation4], 1

</llo_original>
